<compile_context>
chip_gen: v6e
topology: v6e:2x2x1
jax: 0.10.0
libtpu: 0.0.40
codegen_flags: <defaults>
</compile_context>

<pallas_src>
import jax
import jax.numpy as jnp
from jax.experimental import pallas as pl
from jax.experimental.pallas import tpu as pltpu

N_NODES = 16                    # forced by the module's hard-coded 24 = 8 + 16
E_ORIG = 8                      # original edges in edge_index
E_FULL = E_ORIG + N_NODES       # 24 after add_self_loops (reference only)
IN_CH = 8                       # in_channels
OUT_CH = 1                      # out_channels
HEADS = 1                       # num_heads (out_channels * heads must be 1)


def custom_gat_kernel(w1_ref,        # SMEM (1,): fixed_edge_weights_1
                      a_ref,         # VMEM [N, N]: folded scatter@gather operator
                      x_ref,         # VMEM [1, N, F]: this graph's node features
                      out_ref):      # VMEM [1, N, F]
    # out[b] = relu( w1 * (A_agg @ x[b]) )  -- single MXU matmul per graph.
    agg = jnp.dot(a_ref[...], x_ref[0], preferred_element_type=jnp.float32)
    out_ref[0] = jnp.maximum(w1_ref[0] * agg, 0.0)


def custom_gat_forward(x, edge_index, lin_w, lin_b, w1, w2, w3):
    """Forward pass of CustomGAT.

    x: [N, F] or [B, N, F] float32, edge_index: [2, E] int32.
    lin_w / lin_b / w2 / w3 are accepted for interface fidelity but do not
    affect the module's output (dead path in the original forward).
    """
    del lin_w, lin_b, w2, w3   # dead w.r.t. the module's return value
    single = x.ndim == 2
    xb = x[None] if single else x
    B, N, F = xb.shape

    # Fold scatter(tgt) @ gather(src) over the ORIGINAL edges into one [N, N]
    # operator: A_agg[t, s] = number of edges s -> t.
    src, tgt = edge_index[0], edge_index[1]
    a_agg = jnp.matmul(jax.nn.one_hot(tgt, N, dtype=jnp.float32).T,   # [N, E]
                       jax.nn.one_hot(src, N, dtype=jnp.float32))     # [E, N]

    w1_arr = jnp.asarray(w1, jnp.float32).reshape((1,))

    out = pl.pallas_call(
        custom_gat_kernel,
        out_shape=jax.ShapeDtypeStruct((B, N, F), jnp.float32),
        grid=(B,),
        in_specs=[
            pl.BlockSpec(memory_space=pltpu.MemorySpace.SMEM),    # w1 scalar
            pl.BlockSpec((N, N), lambda b: (0, 0)),               # A_agg (grid-invariant, resident)
            pl.BlockSpec((1, N, F), lambda b: (b, 0, 0)),         # x[b]
        ],
        out_specs=pl.BlockSpec((1, N, F), lambda b: (b, 0, 0)),
        compiler_params=pltpu.CompilerParams(
            dimension_semantics=("parallel",)),
    )(w1_arr, a_agg, xb)

    return out[0] if single else out


def reference_forward(x, edge_index, lin_w, lin_b, w1, w2, w3):
    """Pure-JAX transcription of the full PyTorch forward (for verification).

    Includes the learned-scores path to demonstrate that removing it from the
    kernel preserves the module's output exactly.
    """
    N = x.shape[0]
    src, tgt = edge_index[0], edge_index[1]
    loop = jnp.arange(N, dtype=edge_index.dtype)
    src_full = jnp.concatenate([src, loop])
    tgt_full = jnp.concatenate([tgt, loop])
    msg = (x[src_full] - x[tgt_full]) @ lin_w.T + lin_b               # [E_full, 1]
    learned = jnp.zeros((N, 1), jnp.float32).at[tgt_full].add(msg)    # [N, 1]
    fes = jnp.zeros((E_FULL, 1), jnp.float32)
    fes = fes.at[:E_ORIG].set(w1)
    fes = fes.at[E_ORIG::2].set(w2)
    fes = fes.at[E_ORIG + 1::2].set(w3)
    fes = fes.at[E_ORIG:].add(learned)
    agg = jnp.zeros_like(x).at[tgt].add(x[src] * fes[: src.shape[0]])
    return jnp.maximum(agg, 0.0)


if __name__ == "__main__":
    key = jax.random.PRNGKey(0)
    kx, kxb, kw, kb = jax.random.split(key, 4)

    # deterministic synthetic weights (module __init__ gives the shapes)
    x = jax.random.normal(kx, (N_NODES, IN_CH), dtype=jnp.float32)
    lin_w = jax.random.normal(kw, (OUT_CH * HEADS, IN_CH), dtype=jnp.float32) * 0.3
    lin_b = jax.random.normal(kb, (OUT_CH * HEADS,), dtype=jnp.float32) * 0.1
    w1 = jnp.array(1.0, jnp.float32)     # fixed_edge_weights_1
    w2 = jnp.array(-0.5, jnp.float32)    # learnable_edge_weights_2
    w3 = jnp.array(1.5, jnp.float32)     # learnable_edge_weights_3

    # 16 nodes, 8 directed edges (the module's hard-coded constants require this)
    src = jnp.array([0, 1, 2, 3, 4, 5, 6, 7], dtype=jnp.int32)
    tgt = jnp.array([1, 2, 3, 4, 5, 6, 7, 0], dtype=jnp.int32)
    edge_index = jnp.stack([src, tgt])

    fwd = jax.jit(custom_gat_forward)

    # --- single graph (matches the module's hard-coded shapes exactly) ---
    out = jax.block_until_ready(fwd(x, edge_index, lin_w, lin_b, w1, w2, w3))
    ref = reference_forward(x, edge_index, lin_w, lin_b, w1, w2, w3)
    assert out.shape == (N_NODES, IN_CH), out.shape
    assert jnp.allclose(out, ref, atol=1e-5, rtol=1e-5), "single-graph mismatch"

    # --- batched graphs: one grid step per graph, parallel across TCs on v7x ---
    xb = jax.random.normal(kxb, (4, N_NODES, IN_CH), dtype=jnp.float32)
    outb = jax.block_until_ready(fwd(xb, edge_index, lin_w, lin_b, w1, w2, w3))
    refb = jax.vmap(lambda xi: reference_forward(xi, edge_index, lin_w, lin_b,
                                                 w1, w2, w3))(xb)
    assert outb.shape == (4, N_NODES, IN_CH), outb.shape
    assert jnp.allclose(outb, refb, atol=1e-5, rtol=1e-5), "batched mismatch"

    print("KERNEL_OK")
</pallas_src>

<mosaic_0001>
module attributes {stable_mosaic.version = 11 : i64} {
  func.func @custom_gat_kernel(%arg0: i32, %arg1: memref<1xf32, #tpu.memory_space<smem>>, %arg2: memref<16x16xf32, #tpu.memory_space<vmem>>, %arg3: memref<1x16x8xf32, #tpu.memory_space<vmem>>, %arg4: memref<1x16x8xf32, #tpu.memory_space<vmem>>) attributes {dimension_semantics = [#tpu.dimension_semantics<parallel>], iteration_bounds = array<i64: 1>, scalar_prefetch = 0 : i64, scratch_operands = 0 : i64, tpu.core_type = #tpu.core_type<tc>, window_params = [{transform_indices = @transform_0, window_bounds = array<i64: 1>}, {pipeline_mode = #tpu.pipeline_mode<synchronous>, transform_indices = @transform_1, window_bounds = array<i64: 16, 16>}, {transform_indices = @transform_2, window_bounds = array<i64: 1, 16, 8>}, {transform_indices = @transform_3, window_bounds = array<i64: 1, 16, 8>}]} {
    %c0 = arith.constant 0 : index
    %c0_0 = arith.constant 0 : index
    %0 = vector.load %arg2[%c0, %c0_0] : memref<16x16xf32, #tpu.memory_space<vmem>>, vector<16x16xf32>
    %c0_1 = arith.constant 0 : index
    %c0_2 = arith.constant 0 : index
    %c0_3 = arith.constant 0 : index
    %1 = vector.load %arg3[%c0_1, %c0_2, %c0_3] : memref<1x16x8xf32, #tpu.memory_space<vmem>>, vector<1x16x8xf32>
    %2 = vector.shape_cast %1 : vector<1x16x8xf32> to vector<16x8xf32>
    %cst = arith.constant dense<0.000000e+00> : vector<16x8xf32>
    %3 = tpu.matmul %0, %2, %cst {dimension_numbers = #tpu.dot_dimension_numbers<[1], [0], [0], [1], [0, 0, 1, 1], [], []>} : vector<16x16xf32>, vector<16x8xf32>, vector<16x8xf32> -> vector<16x8xf32>
    %c0_4 = arith.constant 0 : index
    %4 = memref.load %arg1[%c0_4] : memref<1xf32, #tpu.memory_space<smem>>
    %5 = vector.broadcast %4 : f32 to vector<16x8xf32>
    %6 = arith.mulf %5, %3 : vector<16x8xf32>
    %cst_5 = arith.constant 0.000000e+00 : f32
    %7 = vector.broadcast %cst_5 : f32 to vector<16x8xf32>
    %8 = arith.maximumf %6, %7 : vector<16x8xf32>
    %c0_6 = arith.constant 0 : index
    %c0_7 = arith.constant 0 : index
    %c0_8 = arith.constant 0 : index
    %9 = vector.load %arg4[%c0_6, %c0_7, %c0_8] : memref<1x16x8xf32, #tpu.memory_space<vmem>>, vector<1x16x8xf32>
    %10 = vector.shape_cast %9 : vector<1x16x8xf32> to vector<16x8xf32>
    %11 = vector.shape_cast %8 : vector<16x8xf32> to vector<1x16x8xf32>
    tpu.vector_store %arg4[%c0_6, %c0_7, %c0_8], %11 {strides = array<i32>} : memref<1x16x8xf32, #tpu.memory_space<vmem>>, vector<1x16x8xf32>,
    return
  }
  func.func @transform_0(%arg0: i32) -> i32 {
    %c0_i32 = arith.constant 0 : i32
    %c0_i32_0 = arith.constant 0 : i32
    return %c0_i32 : i32
  }
  func.func @transform_1(%arg0: i32) -> (i32, i32) {
    %c0_i32 = arith.constant 0 : i32
    %c0_i32_0 = arith.constant 0 : i32
    %c0_i32_1 = arith.constant 0 : i32
    return %c0_i32, %c0_i32_0 : i32, i32
  }
  func.func @transform_2(%arg0: i32) -> (i32, i32, i32) {
    %c0_i32 = arith.constant 0 : i32
    %c0_i32_0 = arith.constant 0 : i32
    %c0_i32_1 = arith.constant 0 : i32
    return %arg0, %c0_i32, %c0_i32_0 : i32, i32, i32
  }
  func.func @transform_3(%arg0: i32) -> (i32, i32, i32) {
    %c0_i32 = arith.constant 0 : i32
    %c0_i32_0 = arith.constant 0 : i32
    %c0_i32_1 = arith.constant 0 : i32
    return %arg0, %c0_i32, %c0_i32_0 : i32, i32, i32
  }
}

</mosaic_0001>

<llo_original>
// kernel: custom_gat_forward.1
$region0: #{custom_gat_forward.1}
  #allocation0 [shape = 'u32[]', space=smem, size = 0x4, offset = 0x4, fixed_abs, tag = 'smem constant byte address 0x4 - core index']
  #allocation1 [shape = 'u32[144,128]{1,0:T(1,128)}', space=vmem, size = 0x12000, scoped, tag = 'internal scratch']
  #allocation2 [shape = 'f32[1]{0:T(128)S(6)}', space=smem, size = 0x200, scoped, tag = 'scoped memory for custom_gat_forward.1']
  %s0 = inlined_call_operand.<no memory space> [shape: f32[1], index: 0, kind: input, shape index: {}]
  %s1 = inlined_call_operand.vmem [shape: f32[16,16], index: 1, kind: input, shape index: {}]
  %s2 = inlined_call_operand.vmem [shape: f32[1,16,8], index: 2, kind: input, shape index: {}]
  %s3 = inlined_call_operand.vmem [shape: f32[1,16,8], index: 3, kind: output, shape index: {}]
  %s4 = sld [smem:[#allocation0]]
  $region22: #{custom_gat_forward.1} parent=0
    _
  %s6 = ssub.s32 1, %s4
  %s7 = scalar_select 0, %s6, %s4
  %8 = sst [smem:[#allocation2]] %s0
  // Predicated region
  $region2: #{custom_gat_forward.1} parent=0 // pred_check
    _
  $region3: #{custom_gat_forward.1} parent=0 // pred_check_branch
    %10 = sbr.rel (0) target = $region5
  $region4: #{custom_gat_forward.1} parent=0 // pred_region
    _
  $region5: #{custom_gat_forward.1} parent=0 // pred_fallthru
    _
  // Predicated region
  $region6: #{custom_gat_forward.1} parent=0 // pred_check
    _
  $region7: #{custom_gat_forward.1} parent=0 // pred_check_branch
    %12 = sbr.rel (0) target = $region9
  $region8: #{custom_gat_forward.1} parent=0 // pred_region
    _
  $region9: #{custom_gat_forward.1} parent=0 // pred_fallthru
    _
  // Predicated region
  $region10: #{custom_gat_forward.1} parent=0 // pred_check
    _
  $region11: #{custom_gat_forward.1} parent=0 // pred_check_branch
    %14 = sbr.rel (0) target = $region13
  $region12: #{custom_gat_forward.1} parent=0 // pred_region
    _
  $region13: #{custom_gat_forward.1} parent=0 // pred_fallthru
    _
  %v15 = vld [vmem:[%s1] sm:$0xff]
  %v16 = vld [vmem:[%s1 + $0x8] sm:$0xff]
  %v17 = vld [vmem:[%s2] sm:$0xff]
  %v18 = vld [vmem:[%s2 + $0x8] sm:$0xff]
  %vm19 = vcmask 130048
  %v21 = vsel %vm19, %v15, 0
  %v24 = vsel %vm19, %v16, 0
  %26 = vmatprep.subr.mxu0 0.0
  %27 = vmatpush1.msra.mxu0 0.0
  %28 = vmatprep.subr.mxu0 0.0
  %29 = vmatpush1.msra.mxu0 0.0
  %30 = vmatprep.subr.mxu0 0.0
  %31 = vmatpush1.msra.mxu0 0.0
  %32 = vmatprep.subr.mxu0 0.0
  %33 = vmatpush1.msra.mxu0 0.0
  %34 = vmatprep.subr.mxu0 0.0
  %35 = vmatpush1.msra.mxu0 0.0
  %36 = vmatprep.subr.mxu0 0.0
  %37 = vmatpush1.msra.mxu0 0.0
  %38 = vmatprep.subr.mxu0 0.0
  %39 = vmatpush1.msra.mxu0 0.0
  %40 = vmatprep.subr.mxu0 0.0
  %41 = vmatpush1.msra.mxu0 0.0
  %42 = vmatprep.subr.mxu0 0.0
  %43 = vmatpush1.msra.mxu0 0.0
  %44 = vmatprep.subr.mxu0 0.0
  %45 = vmatpush1.msra.mxu0 0.0
  %46 = vmatprep.subr.mxu0 0.0
  %47 = vmatpush1.msra.mxu0 0.0
  %48 = vmatprep.subr.mxu0 0.0
  %49 = vmatpush1.msra.mxu0 0.0
  %50 = vmatprep.subr.mxu0 0.0
  %51 = vmatpush1.msra.mxu0 0.0
  %52 = vmatprep.subr.mxu0 0.0
  %53 = vmatpush1.msra.mxu0 0.0
  %54 = vmatprep.subr.mxu0 0.0
  %55 = vmatpush1.msra.mxu0 %v18
  %56 = vmatprep.subr.mxu0 0.0
  %57 = vmatpush1.msra.mxu0 %v17
  %58 = vmatprep.subr.mxu0 0.0
  %59 = vmatpush2.msra.mxu0 0.0
  %60 = vmatprep.subr.mxu0 0.0
  %61 = vmatpush2.msra.mxu0 0.0
  %62 = vmatprep.subr.mxu0 0.0
  %63 = vmatpush2.msra.mxu0 0.0
  %64 = vmatprep.subr.mxu0 0.0
  %65 = vmatpush2.msra.mxu0 0.0
  %66 = vmatprep.subr.mxu0 0.0
  %67 = vmatpush2.msra.mxu0 0.0
  %68 = vmatprep.subr.mxu0 0.0
  %69 = vmatpush2.msra.mxu0 0.0
  %70 = vmatprep.subr.mxu0 0.0
  %71 = vmatpush2.msra.mxu0 0.0
  %72 = vmatprep.subr.mxu0 0.0
  %73 = vmatpush2.msra.mxu0 0.0
  %74 = vmatprep.subr.mxu0 0.0
  %75 = vmatpush2.msra.mxu0 0.0
  %76 = vmatprep.subr.mxu0 0.0
  %77 = vmatpush2.msra.mxu0 0.0
  %78 = vmatprep.subr.mxu0 0.0
  %79 = vmatpush2.msra.mxu0 0.0
  %80 = vmatprep.subr.mxu0 0.0
  %81 = vmatpush2.msra.mxu0 0.0
  %82 = vmatprep.subr.mxu0 0.0
  %83 = vmatpush2.msra.mxu0 0.0
  %84 = vmatprep.subr.mxu0 0.0
  %85 = vmatpush2.msra.mxu0 0.0
  %86 = vmatprep.subr.mxu0 0.0
  %87 = vmatpush2.msra.mxu0 0.0
  %88 = vmatprep.subr.mxu0 0.0
  %89 = vmatpush2.msra.mxu0 0.0
  %90 = vmatprep.mubr.f32.mxu0 0.0
  %91 = vmatmul.mubr.f32.gmra.mxu0 %v21
  %v92 = vpop.f32.mrf.mxu0
  %v93 = vadd.f32 0.0, %v92
  %v94 = vpop.f32.mrf.mxu0
  %95 = vmatprep.mubr.f32.mxu0 0.0
  %96 = vmatmul.mubr.f32.gmra.mxu0 %v24
  %v97 = vpop.f32.mrf.mxu0
  %v98 = vadd.f32 0.0, %v97
  %v99 = vpop.f32.mrf.mxu0
  %100 = vdwg.mxu0
  %s101 = sld [smem:[#allocation2]]
  %v102 = vstv %s101
  %v103 = vmul.f32 %v102, %v93
  %v104 = vmul.f32 %v102, %v98
  %v105 = vmax.f32 %v103, 0.0
  %v106 = vmax.f32 %v104, 0.0
  %vm107 = vcmask 64512
  %108 = vst.msk [vmem:[%s3] sm:$0xff] %vm107, %v105
  %109 = vst.msk [vmem:[%s3 + $0x8] sm:$0xff] %vm107, %v106
  // Predicated region
  $region14: #{custom_gat_forward.1} parent=0 // pred_check
    _
  $region15: #{custom_gat_forward.1} parent=0 // pred_check_branch
    %111 = sbr.rel (0) target = $region17
  $region16: #{custom_gat_forward.1} parent=0 // pred_region
    _
  $region17: #{custom_gat_forward.1} parent=0 // pred_fallthru
    _
  // Predicated region
  $region18: #{custom_gat_forward.1} parent=0 // pred_check
    _
  $region19: #{custom_gat_forward.1} parent=0 // pred_check_branch
    %113 = sbr.rel (0) target = $region21
  $region20: #{custom_gat_forward.1} parent=0 // pred_region
    _
  $region21: #{custom_gat_forward.1} parent=0 // pred_fallthru
    _

</llo_original>
